<compile_context>
chip_gen: v5e
topology: v5e:2x2
jax: 0.10.0
libtpu: 0.0.40
codegen_flags: <defaults>
</compile_context>

<pallas_src>
import functools

import jax
import jax.numpy as jnp
from jax.experimental import pallas as pl
from jax.experimental.pallas import tpu as pltpu


def _pick_tile(n, pref):
    """Largest tile <= pref that is a divisor of n and a multiple of 8 (or full n)."""
    if n <= pref:
        return n
    t = pref - (pref % 8)
    while t >= 8:
        if n % t == 0:
            return t
        t -= 8
    return n


def _spectral_contract_kernel(xr_ref, xi_ref, wa_ref, wd_ref, ws_ref,
                              or_ref, oi_ref):
    """Accumulate one input channel's contribution to the output spectrum.

    Grid = (B_tiles, O_tiles, Cin); the trailing Cin axis is the reduction.
      out[b, o, m] += x[i, b, m] (*) w[i, o, m]     (complex multiply)
    implemented with the Karatsuba identity (3 real multiplies):
      k1 = wr * (xr + xi);  k2 = xr * (wi - wr);  k3 = xi * (wr + wi)
      out_r += k1 - k3;     out_i += k1 + k2
    wa = wr, wd = wi - wr, ws = wr + wi are precomputed in the wrapper.
    """
    i = pl.program_id(2)

    @pl.when(i == 0)
    def _init():
        or_ref[...] = jnp.zeros_like(or_ref)
        oi_ref[...] = jnp.zeros_like(oi_ref)

    xr = xr_ref[0][:, None, :]          # (Bt, 1, Mp)
    xi = xi_ref[0][:, None, :]          # (Bt, 1, Mp)
    wa = wa_ref[0][None, :, :]          # (1, Ot, Mp)   = wr
    wd = wd_ref[0][None, :, :]          # (1, Ot, Mp)   = wi - wr
    ws = ws_ref[0][None, :, :]          # (1, Ot, Mp)   = wr + wi

    k1 = (xr + xi) * wa                 # (Bt, Ot, Mp)
    or_ref[...] += k1 - xi * ws
    oi_ref[...] += k1 + xr * wd


def _spectral_contract(xr, xi, wa, wd, ws):
    """xr, xi: (I, B, Mp) f32;  wa, wd, ws: (I, O, Mp) f32  ->  two (B, O, Mp) f32."""
    I, B, Mp = xr.shape
    O = wa.shape[1]

    Bt = _pick_tile(B, 8)
    Ot = _pick_tile(O, 32)

    x_spec = pl.BlockSpec((1, Bt, Mp), lambda b, o, i: (i, b, 0))
    w_spec = pl.BlockSpec((1, Ot, Mp), lambda b, o, i: (i, o, 0))
    o_spec = pl.BlockSpec((Bt, Ot, Mp), lambda b, o, i: (b, o, 0))

    grid = (B // Bt, O // Ot, I)

    out_r, out_i = pl.pallas_call(
        _spectral_contract_kernel,
        out_shape=(
            jax.ShapeDtypeStruct((B, O, Mp), jnp.float32),
            jax.ShapeDtypeStruct((B, O, Mp), jnp.float32),
        ),
        grid_spec=pltpu.PrefetchScalarGridSpec(
            num_scalar_prefetch=0,
            grid=grid,
            in_specs=[x_spec, x_spec, w_spec, w_spec, w_spec],
            out_specs=(o_spec, o_spec),
        ),
        compiler_params=pltpu.CompilerParams(
            dimension_semantics=("parallel", "parallel", "arbitrary"),
            vmem_limit_bytes=32 * 1024 * 1024,
        ),
    )(xr, xi, wa, wd, ws)
    return out_r, out_i


@functools.partial(jax.jit, static_argnames=("modes_x", "modes_y"))
def fourier_conv2d(x, w_low_r, w_low_i, w_high_r, w_high_i, *, modes_x, modes_y):
    """Forward pass matching the PyTorch FourierConv2d (NCHW input)."""
    B, I, H, W = x.shape
    O = w_low_r.shape[1]
    Wf = W // 2 + 1
    M = modes_x * modes_y
    M2 = 2 * M                                        # low + high fused
    Mp = ((M2 + 127) // 128) * 128                    # lane-dense (>=128) last dim
    pad = Mp - M2

    # TODO(synk): rfft2/irfft2 have no Pallas TPU primitive; done in plain JAX.
    x_fft = jnp.fft.rfft2(x.astype(jnp.float32))      # (B, I, H, Wf) complex64

    # Gather low/high mode corners ONCE and fuse them along the mode axis.
    low = x_fft[:, :, :modes_x, :modes_y].reshape(B, I, M)
    high = x_fft[:, :, -modes_x:, :modes_y].reshape(B, I, M)
    x_modes = jnp.concatenate([low, high], axis=-1)   # (B, I, 2M) complex64

    def prep_x(plane):                                # -> (I, B, Mp) f32
        p = jnp.transpose(plane, (1, 0, 2)).astype(jnp.float32)
        if pad:
            p = jnp.pad(p, ((0, 0), (0, 0), (0, pad)))
        return p

    xr = prep_x(jnp.real(x_modes))
    xi = prep_x(jnp.imag(x_modes))

    # Weights: fuse low/high along modes, precompute Karatsuba planes, pad lanes.
    wr = jnp.concatenate([w_low_r.reshape(I, O, M), w_high_r.reshape(I, O, M)], -1)
    wi = jnp.concatenate([w_low_i.reshape(I, O, M), w_high_i.reshape(I, O, M)], -1)
    wr = wr.astype(jnp.float32)
    wi = wi.astype(jnp.float32)

    def prep_w(plane):                                # -> (I, O, Mp) f32
        if pad:
            plane = jnp.pad(plane, ((0, 0), (0, 0), (0, pad)))
        return plane

    wa = prep_w(wr)            # wr
    wd = prep_w(wi - wr)       # wi - wr
    ws = prep_w(wr + wi)       # wr + wi

    out_r, out_i = _spectral_contract(xr, xi, wa, wd, ws)   # (B, O, Mp)

    # Drop lane padding BEFORE scattering into the spectrum (keeps padding out
    # of untouched spectrum entries), split low/high back apart.
    out_c = jax.lax.complex(out_r[:, :, :M2], out_i[:, :, :M2])
    low_o = out_c[:, :, :M].reshape(B, O, modes_x, modes_y)
    high_o = out_c[:, :, M:].reshape(B, O, modes_x, modes_y)

    out_fft = jnp.zeros((B, O, H, Wf), dtype=jnp.complex64)
    out_fft = out_fft.at[:, :, :modes_x, :modes_y].set(low_o)
    out_fft = out_fft.at[:, :, -modes_x:, :modes_y].set(high_o)

    return jnp.fft.irfft2(out_fft, s=(H, W))          # (B, O, H, W) float32


def _reference(x, w_low_r, w_low_i, w_high_r, w_high_i, modes_x, modes_y):
    """Pure-JAX reference mirroring the PyTorch module, for validation."""
    B, I, H, W = x.shape
    O = w_low_r.shape[1]
    Wf = W // 2 + 1
    w_low = jax.lax.complex(w_low_r, w_low_i)
    w_high = jax.lax.complex(w_high_r, w_high_i)
    x_fft = jnp.fft.rfft2(x.astype(jnp.float32))
    out_fft = jnp.zeros((B, O, H, Wf), dtype=jnp.complex64)
    out_fft = out_fft.at[:, :, :modes_x, :modes_y].set(
        jnp.einsum("bixy,ioxy->boxy", x_fft[:, :, :modes_x, :modes_y], w_low))
    out_fft = out_fft.at[:, :, -modes_x:, :modes_y].set(
        jnp.einsum("bixy,ioxy->boxy", x_fft[:, :, -modes_x:, :modes_y], w_high))
    return jnp.fft.irfft2(out_fft, s=(H, W))


if __name__ == "__main__":
    # Small deterministic problem: batch=2, in_ch=4, out_ch=4, H=W=16, modes=4x4.
    B, Cin, Cout, H, W = 2, 4, 4, 16, 16
    modes_x, modes_y = 4, 4

    key = jax.random.PRNGKey(0)
    kx, klr, kli, khr, khi = jax.random.split(key, 5)

    scale = 1.0 / (Cin * Cout)
    x = jax.random.normal(kx, (B, Cin, H, W), dtype=jnp.float32)
    # torch: scale * rand(..., dtype=cfloat) -> real & imag parts each U[0,1)*scale
    w_low_r = scale * jax.random.uniform(klr, (Cin, Cout, modes_x, modes_y), jnp.float32)
    w_low_i = scale * jax.random.uniform(kli, (Cin, Cout, modes_x, modes_y), jnp.float32)
    w_high_r = scale * jax.random.uniform(khr, (Cin, Cout, modes_x, modes_y), jnp.float32)
    w_high_i = scale * jax.random.uniform(khi, (Cin, Cout, modes_x, modes_y), jnp.float32)

    out = fourier_conv2d(x, w_low_r, w_low_i, w_high_r, w_high_i,
                         modes_x=modes_x, modes_y=modes_y)
    out = jax.block_until_ready(out)

    ref = _reference(x, w_low_r, w_low_i, w_high_r, w_high_i, modes_x, modes_y)
    assert out.shape == (B, Cout, H, W)
    assert jnp.allclose(out, ref, atol=1e-4, rtol=1e-4), "mismatch vs reference"

    print("KERNEL_OK")
</pallas_src>

<mosaic_0001>
module attributes {stable_mosaic.version = 11 : i64} {
  func.func @_spectral_contract_kernel(%arg0: i32, %arg1: i32, %arg2: i32, %arg3: memref<1x2x128xf32, #tpu.memory_space<vmem>>, %arg4: memref<1x2x128xf32, #tpu.memory_space<vmem>>, %arg5: memref<1x4x128xf32, #tpu.memory_space<vmem>>, %arg6: memref<1x4x128xf32, #tpu.memory_space<vmem>>, %arg7: memref<1x4x128xf32, #tpu.memory_space<vmem>>, %arg8: memref<2x4x128xf32, #tpu.memory_space<vmem>>, %arg9: memref<2x4x128xf32, #tpu.memory_space<vmem>>) attributes {dimension_semantics = [#tpu.dimension_semantics<parallel>, #tpu.dimension_semantics<parallel>, #tpu.dimension_semantics<arbitrary>], iteration_bounds = array<i64: 1, 1, 4>, scalar_prefetch = 0 : i64, scratch_operands = 0 : i64, tpu.core_type = #tpu.core_type<tc>, window_params = [{transform_indices = @transform_0, window_bounds = array<i64: 1, 2, 128>}, {transform_indices = @transform_1, window_bounds = array<i64: 1, 2, 128>}, {transform_indices = @transform_2, window_bounds = array<i64: 1, 4, 128>}, {transform_indices = @transform_3, window_bounds = array<i64: 1, 4, 128>}, {transform_indices = @transform_4, window_bounds = array<i64: 1, 4, 128>}, {transform_indices = @transform_5, window_bounds = array<i64: 2, 4, 128>}, {transform_indices = @transform_6, window_bounds = array<i64: 2, 4, 128>}]} {
    %c0_i32 = arith.constant 0 : i32
    %0 = arith.cmpi eq, %arg2, %c0_i32 : i32
    %1 = arith.extui %0 : i1 to i32
    %c0_i32_0 = arith.constant 0 : i32
    %2 = arith.cmpi ne, %1, %c0_i32_0 : i32
    scf.if %2 {
      %cst = arith.constant 0.000000e+00 : f32
      %36 = vector.broadcast %cst : f32 to vector<2x4x128xf32>
      %c0_27 = arith.constant 0 : index
      %c0_28 = arith.constant 0 : index
      %c0_29 = arith.constant 0 : index
      %37 = vector.load %arg8[%c0_27, %c0_28, %c0_29] : memref<2x4x128xf32, #tpu.memory_space<vmem>>, vector<2x4x128xf32>
      tpu.vector_store %arg8[%c0_27, %c0_28, %c0_29], %36 {strides = array<i32>} : memref<2x4x128xf32, #tpu.memory_space<vmem>>, vector<2x4x128xf32>,
      %cst_30 = arith.constant 0.000000e+00 : f32
      %38 = vector.broadcast %cst_30 : f32 to vector<2x4x128xf32>
      %c0_31 = arith.constant 0 : index
      %c0_32 = arith.constant 0 : index
      %c0_33 = arith.constant 0 : index
      %39 = vector.load %arg9[%c0_31, %c0_32, %c0_33] : memref<2x4x128xf32, #tpu.memory_space<vmem>>, vector<2x4x128xf32>
      tpu.vector_store %arg9[%c0_31, %c0_32, %c0_33], %38 {strides = array<i32>} : memref<2x4x128xf32, #tpu.memory_space<vmem>>, vector<2x4x128xf32>,
    } else {
    }
    %c0 = arith.constant 0 : index
    %c0_1 = arith.constant 0 : index
    %c0_2 = arith.constant 0 : index
    %3 = vector.load %arg3[%c0, %c0_1, %c0_2] : memref<1x2x128xf32, #tpu.memory_space<vmem>>, vector<1x2x128xf32>
    %4 = vector.shape_cast %3 : vector<1x2x128xf32> to vector<2x128xf32>
    %5 = vector.shape_cast %4 : vector<2x128xf32> to vector<2x1x128xf32>
    %c0_3 = arith.constant 0 : index
    %c0_4 = arith.constant 0 : index
    %c0_5 = arith.constant 0 : index
    %6 = vector.load %arg4[%c0_3, %c0_4, %c0_5] : memref<1x2x128xf32, #tpu.memory_space<vmem>>, vector<1x2x128xf32>
    %7 = vector.shape_cast %6 : vector<1x2x128xf32> to vector<2x128xf32>
    %8 = vector.shape_cast %7 : vector<2x128xf32> to vector<2x1x128xf32>
    %c0_6 = arith.constant 0 : index
    %c0_7 = arith.constant 0 : index
    %c0_8 = arith.constant 0 : index
    %9 = vector.load %arg5[%c0_6, %c0_7, %c0_8] : memref<1x4x128xf32, #tpu.memory_space<vmem>>, vector<1x4x128xf32>
    %10 = vector.shape_cast %9 : vector<1x4x128xf32> to vector<4x128xf32>
    %11 = vector.shape_cast %10 : vector<4x128xf32> to vector<1x4x128xf32>
    %c0_9 = arith.constant 0 : index
    %c0_10 = arith.constant 0 : index
    %c0_11 = arith.constant 0 : index
    %12 = vector.load %arg6[%c0_9, %c0_10, %c0_11] : memref<1x4x128xf32, #tpu.memory_space<vmem>>, vector<1x4x128xf32>
    %13 = vector.shape_cast %12 : vector<1x4x128xf32> to vector<4x128xf32>
    %14 = vector.shape_cast %13 : vector<4x128xf32> to vector<1x4x128xf32>
    %c0_12 = arith.constant 0 : index
    %c0_13 = arith.constant 0 : index
    %c0_14 = arith.constant 0 : index
    %15 = vector.load %arg7[%c0_12, %c0_13, %c0_14] : memref<1x4x128xf32, #tpu.memory_space<vmem>>, vector<1x4x128xf32>
    %16 = vector.shape_cast %15 : vector<1x4x128xf32> to vector<4x128xf32>
    %17 = vector.shape_cast %16 : vector<4x128xf32> to vector<1x4x128xf32>
    %18 = arith.addf %5, %8 : vector<2x1x128xf32>
    %19 = vector.broadcast %18 : vector<2x1x128xf32> to vector<2x4x128xf32>
    %20 = vector.broadcast %11 : vector<1x4x128xf32> to vector<2x4x128xf32>
    %21 = arith.mulf %19, %20 : vector<2x4x128xf32>
    %c0_15 = arith.constant 0 : index
    %c0_16 = arith.constant 0 : index
    %c0_17 = arith.constant 0 : index
    %22 = vector.load %arg8[%c0_15, %c0_16, %c0_17] : memref<2x4x128xf32, #tpu.memory_space<vmem>>, vector<2x4x128xf32>
    %23 = vector.broadcast %8 : vector<2x1x128xf32> to vector<2x4x128xf32>
    %24 = vector.broadcast %17 : vector<1x4x128xf32> to vector<2x4x128xf32>
    %25 = arith.mulf %23, %24 : vector<2x4x128xf32>
    %26 = arith.subf %21, %25 : vector<2x4x128xf32>
    %27 = arith.addf %22, %26 : vector<2x4x128xf32>
    %c0_18 = arith.constant 0 : index
    %c0_19 = arith.constant 0 : index
    %c0_20 = arith.constant 0 : index
    %28 = vector.load %arg8[%c0_18, %c0_19, %c0_20] : memref<2x4x128xf32, #tpu.memory_space<vmem>>, vector<2x4x128xf32>
    tpu.vector_store %arg8[%c0_18, %c0_19, %c0_20], %27 {strides = array<i32>} : memref<2x4x128xf32, #tpu.memory_space<vmem>>, vector<2x4x128xf32>,
    %c0_21 = arith.constant 0 : index
    %c0_22 = arith.constant 0 : index
    %c0_23 = arith.constant 0 : index
    %29 = vector.load %arg9[%c0_21, %c0_22, %c0_23] : memref<2x4x128xf32, #tpu.memory_space<vmem>>, vector<2x4x128xf32>
    %30 = vector.broadcast %5 : vector<2x1x128xf32> to vector<2x4x128xf32>
    %31 = vector.broadcast %14 : vector<1x4x128xf32> to vector<2x4x128xf32>
    %32 = arith.mulf %30, %31 : vector<2x4x128xf32>
    %33 = arith.addf %21, %32 : vector<2x4x128xf32>
    %34 = arith.addf %29, %33 : vector<2x4x128xf32>
    %c0_24 = arith.constant 0 : index
    %c0_25 = arith.constant 0 : index
    %c0_26 = arith.constant 0 : index
    %35 = vector.load %arg9[%c0_24, %c0_25, %c0_26] : memref<2x4x128xf32, #tpu.memory_space<vmem>>, vector<2x4x128xf32>
    tpu.vector_store %arg9[%c0_24, %c0_25, %c0_26], %34 {strides = array<i32>} : memref<2x4x128xf32, #tpu.memory_space<vmem>>, vector<2x4x128xf32>,
    return
  }
  func.func @transform_0(%arg0: i32, %arg1: i32, %arg2: i32) -> (i32, i32, i32) {
    %c0_i32 = arith.constant 0 : i32
    %c0_i32_0 = arith.constant 0 : i32
    return %arg2, %arg0, %c0_i32 : i32, i32, i32
  }
  func.func @transform_1(%arg0: i32, %arg1: i32, %arg2: i32) -> (i32, i32, i32) {
    %c0_i32 = arith.constant 0 : i32
    %c0_i32_0 = arith.constant 0 : i32
    return %arg2, %arg0, %c0_i32 : i32, i32, i32
  }
  func.func @transform_2(%arg0: i32, %arg1: i32, %arg2: i32) -> (i32, i32, i32) {
    %c0_i32 = arith.constant 0 : i32
    %c0_i32_0 = arith.constant 0 : i32
    return %arg2, %arg1, %c0_i32 : i32, i32, i32
  }
  func.func @transform_3(%arg0: i32, %arg1: i32, %arg2: i32) -> (i32, i32, i32) {
    %c0_i32 = arith.constant 0 : i32
    %c0_i32_0 = arith.constant 0 : i32
    return %arg2, %arg1, %c0_i32 : i32, i32, i32
  }
  func.func @transform_4(%arg0: i32, %arg1: i32, %arg2: i32) -> (i32, i32, i32) {
    %c0_i32 = arith.constant 0 : i32
    %c0_i32_0 = arith.constant 0 : i32
    return %arg2, %arg1, %c0_i32 : i32, i32, i32
  }
  func.func @transform_5(%arg0: i32, %arg1: i32, %arg2: i32) -> (i32, i32, i32) {
    %c0_i32 = arith.constant 0 : i32
    %c0_i32_0 = arith.constant 0 : i32
    return %arg0, %arg1, %c0_i32 : i32, i32, i32
  }
  func.func @transform_6(%arg0: i32, %arg1: i32, %arg2: i32) -> (i32, i32, i32) {
    %c0_i32 = arith.constant 0 : i32
    %c0_i32_0 = arith.constant 0 : i32
    return %arg0, %arg1, %c0_i32 : i32, i32, i32
  }
}

</mosaic_0001>

<llo_original>
// kernel: fourier_conv2d.1
$region0: #{fourier_conv2d.1}
  #allocation0 [shape = 'u32[]', space=smem, size = 0x4, offset = 0x4, fixed_abs, tag = 'smem constant byte address 0x4 - core index']
  #allocation1 [shape = 'u32[72,128]{1,0:T(1,128)}', space=vmem, size = 0x9000, scoped, tag = 'internal scratch']
  %s0 = inlined_call_operand.vmem [shape: f32[4,2,128], index: 0, kind: input, shape index: {}]
  %s1 = inlined_call_operand.vmem [shape: f32[4,2,128], index: 1, kind: input, shape index: {}]
  %s2 = inlined_call_operand.vmem [shape: f32[4,4,128], index: 2, kind: input, shape index: {}]
  %s3 = inlined_call_operand.vmem [shape: f32[4,4,128], index: 3, kind: input, shape index: {}]
  %s4 = inlined_call_operand.vmem [shape: f32[4,4,128], index: 4, kind: input, shape index: {}]
  %s5 = inlined_call_operand.vmem [shape: f32[2,4,128], index: 5, kind: output, shape index: {0}]
  %s6 = inlined_call_operand.vmem [shape: f32[2,4,128], index: 6, kind: output, shape index: {1}]
  %7 = xla_tuple %s5, %s6
  %s8 = sld [smem:[#allocation0]]
  $region65: #{fourier_conv2d.1} parent=0
    _
  %s10 = ssub.s32 1, %s8
  %s11 = scalar_select 0, %s10, %s8
  loop: start=0, step=1, limit=6
  $region2: #{fourier_conv2d.1} parent=0 // loop_pre_header
    _
  $region3: #{fourier_conv2d.1} parent=0 // loop_header
    %s13 = sphi 0, %s17
    %p14 = scmp.ge.s32.totalorder %s13, 6
    %s20 = sphi 0, %s39
    %s21 = sphi 0, %s35
    %s22 = sphi 0, %s31
    %s23 = sphi 0, %s20
    %s24 = sphi 0, %s21
    %s25 = sphi 0, %s22
    %s26 = sphi 0, %s23
    %s27 = sphi 0, %s24
    %s28 = sphi 0, %s25
    %s44 = sphi 0, %s46
    %s47 = sphi 0, %s44
    %s48 = sphi 0, %s47
    %s64 = sphi 0, %s48
    %s72 = sphi 0, %s74
    %s75 = sphi 0, %s72
    %s76 = sphi 0, %s75
    %s92 = sphi 0, %s76
    %s100 = sphi 0, %s102
    %s103 = sphi 0, %s100
    %s104 = sphi 0, %s103
    %s120 = sphi 0, %s104
    %s128 = sphi 0, %s130
    %s131 = sphi 0, %s128
    %s132 = sphi 0, %s131
    %s148 = sphi 0, %s132
    %s156 = sphi 0, %s158
    %s159 = sphi 0, %s156
    %s160 = sphi 0, %s159
    %s176 = sphi 0, %s160
    %s184 = sphi 0, %s186
    %s187 = sphi 0, %s184
    %s188 = sphi 0, %s187
    %s204 = sphi 0, %s188
    %s212 = sphi 0, %s214
    %s215 = sphi 0, %s212
    %s216 = sphi 0, %s215
    %s232 = sphi 0, %s216
  $region4: #{fourier_conv2d.1} parent=0 // loop_header_branch
    %16 = sbr.rel (%p14) target = $region8
  $region5: #{fourier_conv2d.1} parent=0 // loop_body
    %s18 = ssub.s32 %s13, 1
    %s19 = ssub.s32 %s13, 2
    %s29 = sadd.s32 1, %s22
    %p30 = scmp.ge.s32.totalorder %s29, 4
    %s31 = scalar_select %p30, 0, %s29
    %s32 = sadd.s32 1, %s21
    %s33 = scalar_select %p30, %s32, %s21
    %p34 = scmp.ge.s32.totalorder %s33, 1
    %s35 = scalar_select %p34, 0, %s33
    %s36 = sadd.s32 1, %s20
    %s37 = scalar_select %p34, %s36, %s20
    %p38 = scmp.ge.s32.totalorder %s37, 1
    %s39 = scalar_select %p38, 0, %s37
    %s40 = ssub.s32 %s22, %s31
    %s41 = ssub.s32 %s20, %s39
    %s42 = sor.u32 %s40, %s41
    %p43 = scmp.eq.s32.totalorder %s42, 0
    %s45 = sadd.s32 %s44, 1
    %s46 = scalar_select %p43, %s44, %s45
    %p49 = pneg %p43
    %p50 = scmp.eq.s32.totalorder %s13, 3
    %p51 = por %p49, %p50
    %p52 = scmp.ne.s32.totalorder %s44, %s47
    %p53 = scmp.eq.s32.totalorder %s13, 0
    %p54 = por %p52, %p53
    %p55 = scmp.ne.s32.totalorder %s44, %s47
    %p56 = scmp.eq.s32.totalorder %s18, 3
    %p57 = por %p55, %p56
    %p58 = scmp.ne.s32.totalorder %s47, %s48
    %p59 = scmp.eq.s32.totalorder %s18, 0
    %p60 = por %p58, %p59
    %p61 = scmp.ne.s32.totalorder %s47, %s48
    %p62 = scmp.eq.s32.totalorder %s19, 3
    %p63 = por %p61, %p62
    %p65 = scmp.ne.s32.totalorder %s48, %s64
    %p66 = scmp.eq.s32.totalorder %s19, 0
    %p67 = por %p65, %p66
    %s68 = ssub.s32 %s22, %s31
    %s69 = ssub.s32 %s20, %s39
    %s70 = sor.u32 %s68, %s69
    %p71 = scmp.eq.s32.totalorder %s70, 0
    %s73 = sadd.s32 %s72, 1
    %s74 = scalar_select %p71, %s72, %s73
    %p77 = pneg %p71
    %p78 = scmp.eq.s32.totalorder %s13, 3
    %p79 = por %p77, %p78
    %p80 = scmp.ne.s32.totalorder %s72, %s75
    %p81 = scmp.eq.s32.totalorder %s13, 0
    %p82 = por %p80, %p81
    %p83 = scmp.ne.s32.totalorder %s72, %s75
    %p84 = scmp.eq.s32.totalorder %s18, 3
    %p85 = por %p83, %p84
    %p86 = scmp.ne.s32.totalorder %s75, %s76
    %p87 = scmp.eq.s32.totalorder %s18, 0
    %p88 = por %p86, %p87
    %p89 = scmp.ne.s32.totalorder %s75, %s76
    %p90 = scmp.eq.s32.totalorder %s19, 3
    %p91 = por %p89, %p90
    %p93 = scmp.ne.s32.totalorder %s76, %s92
    %p94 = scmp.eq.s32.totalorder %s19, 0
    %p95 = por %p93, %p94
    %s96 = ssub.s32 %s22, %s31
    %s97 = ssub.s32 %s21, %s35
    %s98 = sor.u32 %s96, %s97
    %p99 = scmp.eq.s32.totalorder %s98, 0
    %s101 = sadd.s32 %s100, 1
    %s102 = scalar_select %p99, %s100, %s101
    %p105 = pneg %p99
    %p106 = scmp.eq.s32.totalorder %s13, 3
    %p107 = por %p105, %p106
    %p108 = scmp.ne.s32.totalorder %s100, %s103
    %p109 = scmp.eq.s32.totalorder %s13, 0
    %p110 = por %p108, %p109
    %p111 = scmp.ne.s32.totalorder %s100, %s103
    %p112 = scmp.eq.s32.totalorder %s18, 3
    %p113 = por %p111, %p112
    %p114 = scmp.ne.s32.totalorder %s103, %s104
    %p115 = scmp.eq.s32.totalorder %s18, 0
    %p116 = por %p114, %p115
    %p117 = scmp.ne.s32.totalorder %s103, %s104
    %p118 = scmp.eq.s32.totalorder %s19, 3
    %p119 = por %p117, %p118
    %p121 = scmp.ne.s32.totalorder %s104, %s120
    %p122 = scmp.eq.s32.totalorder %s19, 0
    %p123 = por %p121, %p122
    %s124 = ssub.s32 %s22, %s31
    %s125 = ssub.s32 %s21, %s35
    %s126 = sor.u32 %s124, %s125
    %p127 = scmp.eq.s32.totalorder %s126, 0
    %s129 = sadd.s32 %s128, 1
    %s130 = scalar_select %p127, %s128, %s129
    %p133 = pneg %p127
    %p134 = scmp.eq.s32.totalorder %s13, 3
    %p135 = por %p133, %p134
    %p136 = scmp.ne.s32.totalorder %s128, %s131
    %p137 = scmp.eq.s32.totalorder %s13, 0
    %p138 = por %p136, %p137
    %p139 = scmp.ne.s32.totalorder %s128, %s131
    %p140 = scmp.eq.s32.totalorder %s18, 3
    %p141 = por %p139, %p140
    %p142 = scmp.ne.s32.totalorder %s131, %s132
    %p143 = scmp.eq.s32.totalorder %s18, 0
    %p144 = por %p142, %p143
    %p145 = scmp.ne.s32.totalorder %s131, %s132
    %p146 = scmp.eq.s32.totalorder %s19, 3
    %p147 = por %p145, %p146
    %p149 = scmp.ne.s32.totalorder %s132, %s148
    %p150 = scmp.eq.s32.totalorder %s19, 0
    %p151 = por %p149, %p150
    %s152 = ssub.s32 %s22, %s31
    %s153 = ssub.s32 %s21, %s35
    %s154 = sor.u32 %s152, %s153
    %p155 = scmp.eq.s32.totalorder %s154, 0
    %s157 = sadd.s32 %s156, 1
    %s158 = scalar_select %p155, %s156, %s157
    %p161 = pneg %p155
    %p162 = scmp.eq.s32.totalorder %s13, 3
    %p163 = por %p161, %p162
    %p164 = scmp.ne.s32.totalorder %s156, %s159
    %p165 = scmp.eq.s32.totalorder %s13, 0
    %p166 = por %p164, %p165
    %p167 = scmp.ne.s32.totalorder %s156, %s159
    %p168 = scmp.eq.s32.totalorder %s18, 3
    %p169 = por %p167, %p168
    %p170 = scmp.ne.s32.totalorder %s159, %s160
    %p171 = scmp.eq.s32.totalorder %s18, 0
    %p172 = por %p170, %p171
    %p173 = scmp.ne.s32.totalorder %s159, %s160
    %p174 = scmp.eq.s32.totalorder %s19, 3
    %p175 = por %p173, %p174
    %p177 = scmp.ne.s32.totalorder %s160, %s176
    %p178 = scmp.eq.s32.totalorder %s19, 0
    %p179 = por %p177, %p178
    %s180 = ssub.s32 %s20, %s39
    %s181 = ssub.s32 %s21, %s35
    %s182 = sor.u32 %s180, %s181
    %p183 = scmp.eq.s32.totalorder %s182, 0
    %s185 = sadd.s32 %s184, 1
    %s186 = scalar_select %p183, %s184, %s185
    %p189 = pneg %p183
    %p190 = scmp.eq.s32.totalorder %s13, 3
    %p191 = por %p189, %p190
    %p192 = scmp.ne.s32.totalorder %s184, %s187
    %p193 = scmp.eq.s32.totalorder %s13, 0
    %p194 = por %p192, %p193
    %p195 = scmp.ne.s32.totalorder %s184, %s187
    %p196 = scmp.eq.s32.totalorder %s18, 3
    %p197 = por %p195, %p196
    %p198 = scmp.ne.s32.totalorder %s187, %s188
    %p199 = scmp.eq.s32.totalorder %s18, 0
    %p200 = por %p198, %p199
    %p201 = scmp.ne.s32.totalorder %s187, %s188
    %p202 = scmp.eq.s32.totalorder %s19, 3
    %p203 = por %p201, %p202
    %p205 = scmp.ne.s32.totalorder %s188, %s204
    %p206 = scmp.eq.s32.totalorder %s19, 0
    %p207 = por %p205, %p206
    %s208 = ssub.s32 %s20, %s39
    %s209 = ssub.s32 %s21, %s35
    %s210 = sor.u32 %s208, %s209
    %p211 = scmp.eq.s32.totalorder %s210, 0
    %s213 = sadd.s32 %s212, 1
    %s214 = scalar_select %p211, %s212, %s213
    %p217 = pneg %p211
    %p218 = scmp.eq.s32.totalorder %s13, 3
    %p219 = por %p217, %p218
    %p220 = scmp.ne.s32.totalorder %s212, %s215
    %p221 = scmp.eq.s32.totalorder %s13, 0
    %p222 = por %p220, %p221
    %p223 = scmp.ne.s32.totalorder %s212, %s215
    %p224 = scmp.eq.s32.totalorder %s18, 3
    %p225 = por %p223, %p224
    %p226 = scmp.ne.s32.totalorder %s215, %s216
    %p227 = scmp.eq.s32.totalorder %s18, 0
    %p228 = por %p226, %p227
    %p229 = scmp.ne.s32.totalorder %s215, %s216
    %p230 = scmp.eq.s32.totalorder %s19, 3
    %p231 = por %p229, %p230
    %p233 = scmp.ne.s32.totalorder %s216, %s232
    %p234 = scmp.eq.s32.totalorder %s19, 0
    %p235 = por %p233, %p234
    %p236 = scmp.le.s32.totalorder 1, %s13
    %p237 = scmp.lt.s32.totalorder %s13, 5
    %p238 = pnand %p236, %p237
    %p239 = pneg %p238
    // Predicated region
    $region9: #{fourier_conv2d.1} parent=5 // pred_check
      _
    $region10: #{fourier_conv2d.1} parent=5 // pred_check_branch
      %241 = sbr.rel (%p238) target = $region12
    $region11: #{fourier_conv2d.1} parent=5 // pred_region
      %s242 = ssub.s32 %s13, 1
    $region12: #{fourier_conv2d.1} parent=5 // pred_fallthru
      _
    %p243 = scmp.lt.s32.totalorder %s13, 4
    // Predicated region
    $region13: #{fourier_conv2d.1} parent=5 // pred_check
      %p244 = pneg %p243
    $region14: #{fourier_conv2d.1} parent=5 // pred_check_branch
      %246 = sbr.rel (%p244) target = $region16
    $region15: #{fourier_conv2d.1} parent=5 // pred_region
      // Predicated region
      $region17: #{fourier_conv2d.1} parent=15 // pred_check
        %p247 = pneg %p54
      $region18: #{fourier_conv2d.1} parent=15 // pred_check_branch
        %249 = sbr.rel (%p247) target = $region20
      $region19: #{fourier_conv2d.1} parent=15 // pred_region
        %p250 = scmp.lt.s32.totalorder %s22, 3
        %s251 = scalar_select %p250, %s22, 3
        %p252 = scmp.lt.s32.totalorder %s20, 0
        %s253 = scalar_select %p252, %s20, 0
        %s254 = sadd.s32 %s253, %s251
        %s255 = smul.addr %s254, 2
        %s256 = scalar_lea.vmem %s0, %s255
      $region20: #{fourier_conv2d.1} parent=15 // pred_fallthru
        _
      // Predicated region
      $region21: #{fourier_conv2d.1} parent=15 // pred_check
        %p257 = pneg %p82
      $region22: #{fourier_conv2d.1} parent=15 // pred_check_branch
        %259 = sbr.rel (%p257) target = $region24
      $region23: #{fourier_conv2d.1} parent=15 // pred_region
        %p260 = scmp.lt.s32.totalorder %s22, 3
        %s261 = scalar_select %p260, %s22, 3
        %p262 = scmp.lt.s32.totalorder %s20, 0
        %s263 = scalar_select %p262, %s20, 0
        %s264 = sadd.s32 %s263, %s261
        %s265 = smul.addr %s264, 2
        %s266 = scalar_lea.vmem %s1, %s265
      $region24: #{fourier_conv2d.1} parent=15 // pred_fallthru
        _
      // Predicated region
      $region25: #{fourier_conv2d.1} parent=15 // pred_check
        %p267 = pneg %p110
      $region26: #{fourier_conv2d.1} parent=15 // pred_check_branch
        %269 = sbr.rel (%p267) target = $region28
      $region27: #{fourier_conv2d.1} parent=15 // pred_region
        %p270 = scmp.lt.s32.totalorder %s22, 3
        %s271 = scalar_select %p270, %s22, 3
        %p272 = scmp.lt.s32.totalorder %s21, 0
        %s273 = scalar_select %p272, %s21, 0
        %s274 = sadd.s32 %s273, %s271
        %s275 = smul.addr %s274, 4
        %s276 = scalar_lea.vmem %s2, %s275
      $region28: #{fourier_conv2d.1} parent=15 // pred_fallthru
        _
      // Predicated region
      $region29: #{fourier_conv2d.1} parent=15 // pred_check
        %p277 = pneg %p138
      $region30: #{fourier_conv2d.1} parent=15 // pred_check_branch
        %279 = sbr.rel (%p277) target = $region32
      $region31: #{fourier_conv2d.1} parent=15 // pred_region
        %p280 = scmp.lt.s32.totalorder %s22, 3
        %s281 = scalar_select %p280, %s22, 3
        %p282 = scmp.lt.s32.totalorder %s21, 0
        %s283 = scalar_select %p282, %s21, 0
        %s284 = sadd.s32 %s283, %s281
        %s285 = smul.addr %s284, 4
        %s286 = scalar_lea.vmem %s3, %s285
      $region32: #{fourier_conv2d.1} parent=15 // pred_fallthru
        _
      // Predicated region
      $region33: #{fourier_conv2d.1} parent=15 // pred_check
        %p287 = pneg %p166
      $region34: #{fourier_conv2d.1} parent=15 // pred_check_branch
        %289 = sbr.rel (%p287) target = $region36
      $region35: #{fourier_conv2d.1} parent=15 // pred_region
        %p290 = scmp.lt.s32.totalorder %s22, 3
        %s291 = scalar_select %p290, %s22, 3
        %p292 = scmp.lt.s32.totalorder %s21, 0
        %s293 = scalar_select %p292, %s21, 0
        %s294 = sadd.s32 %s293, %s291
        %s295 = smul.addr %s294, 4
        %s296 = scalar_lea.vmem %s4, %s295
      $region36: #{fourier_conv2d.1} parent=15 // pred_fallthru
        _
    $region16: #{fourier_conv2d.1} parent=5 // pred_fallthru
      _
    %p297 = scmp.le.s32.totalorder 1, %s13
    %p298 = scmp.lt.s32.totalorder %s13, 5
    %p299 = pnand %p297, %p298
    %p300 = pneg %p299
    // Predicated region
    $region37: #{fourier_conv2d.1} parent=5 // pred_check
      _
    $region38: #{fourier_conv2d.1} parent=5 // pred_check_branch
      %302 = sbr.rel (%p299) target = $region40
    $region39: #{fourier_conv2d.1} parent=5 // pred_region
      %s303 = ssub.s32 %s13, 1
      %p304 = scmp.lt.s32.totalorder %s25, 3
      %s305 = scalar_select %p304, %s25, 3
      %p306 = scmp.lt.s32.totalorder %s23, 0
      %s307 = scalar_select %p306, %s23, 0
      %s308 = sadd.s32 %s307, %s305
      %s309 = smul.addr %s308, 2
      %s310 = scalar_lea.vmem %s0, %s309
      %p311 = pneg %p60
      %p312 = pneg %p57
      %p313 = scmp.lt.s32.totalorder %s25, 3
      %s314 = scalar_select %p313, %s25, 3
      %p315 = scmp.lt.s32.totalorder %s23, 0
      %s316 = scalar_select %p315, %s23, 0
      %s317 = sadd.s32 %s316, %s314
      %s318 = smul.addr %s317, 2
      %s319 = scalar_lea.vmem %s1, %s318
      %p320 = pneg %p88
      %p321 = pneg %p85
      %p322 = scmp.lt.s32.totalorder %s25, 3
      %s323 = scalar_select %p322, %s25, 3
      %p324 = scmp.lt.s32.totalorder %s24, 0
      %s325 = scalar_select %p324, %s24, 0
      %s326 = sadd.s32 %s325, %s323
      %s327 = smul.addr %s326, 4
      %s328 = scalar_lea.vmem %s2, %s327
      %p329 = pneg %p116
      %p330 = pneg %p113
      %p331 = scmp.lt.s32.totalorder %s25, 3
      %s332 = scalar_select %p331, %s25, 3
      %p333 = scmp.lt.s32.totalorder %s24, 0
      %s334 = scalar_select %p333, %s24, 0
      %s335 = sadd.s32 %s334, %s332
      %s336 = smul.addr %s335, 4
      %s337 = scalar_lea.vmem %s3, %s336
      %p338 = pneg %p144
      %p339 = pneg %p141
      %p340 = scmp.lt.s32.totalorder %s25, 3
      %s341 = scalar_select %p340, %s25, 3
      %p342 = scmp.lt.s32.totalorder %s24, 0
      %s343 = scalar_select %p342, %s24, 0
      %s344 = sadd.s32 %s343, %s341
      %s345 = smul.addr %s344, 4
      %s346 = scalar_lea.vmem %s4, %s345
      %p347 = pneg %p172
      %p348 = pneg %p169
      %p349 = pneg %p200
      %p350 = pneg %p197
      %s351 = smul.u32 2, %s23
      %p352 = scmp.lt.s32.totalorder %s351, 1
      %s353 = scalar_select %p352, %s351, 1
      %p354 = scmp.lt.s32.totalorder %s24, 0
      %s355 = scalar_select %p354, %s24, 0
      %s356 = sadd.s32 %s355, %s353
      %s357 = smul.addr %s356, 4
      %s358 = scalar_lea.vmem %s5, %s357
      %p359 = pneg %p228
      %p360 = pneg %p225
      %s361 = smul.u32 2, %s23
      %p362 = scmp.lt.s32.totalorder %s361, 1
      %s363 = scalar_select %p362, %s361, 1
      %p364 = scmp.lt.s32.totalorder %s24, 0
      %s365 = scalar_select %p364, %s24, 0
      %s366 = sadd.s32 %s365, %s363
      %s367 = smul.addr %s366, 4
      %s368 = scalar_lea.vmem %s6, %s367
      %p369 = scmp.lt.s32.totalorder %s25, 3
      %s370 = scalar_select %p369, %s25, 3
      %p371 = scmp.lt.s32.totalorder %s23, 0
      %s372 = scalar_select %p371, %s23, 0
      %s373 = sadd.s32 %s372, %s370
      %s374 = smul.addr %s373, 2
      %s375 = scalar_lea.vmem %s0, %s374
      %p376 = scmp.lt.s32.totalorder %s25, 3
      %s377 = scalar_select %p376, %s25, 3
      %p378 = scmp.lt.s32.totalorder %s23, 0
      %s379 = scalar_select %p378, %s23, 0
      %s380 = sadd.s32 %s379, %s377
      %s381 = smul.addr %s380, 2
      %s382 = scalar_lea.vmem %s1, %s381
      %p383 = scmp.lt.s32.totalorder %s25, 3
      %s384 = scalar_select %p383, %s25, 3
      %p385 = scmp.lt.s32.totalorder %s24, 0
      %s386 = scalar_select %p385, %s24, 0
      %s387 = sadd.s32 %s386, %s384
      %s388 = smul.addr %s387, 4
      %s389 = scalar_lea.vmem %s2, %s388
      %p390 = scmp.lt.s32.totalorder %s25, 3
      %s391 = scalar_select %p390, %s25, 3
      %p392 = scmp.lt.s32.totalorder %s24, 0
      %s393 = scalar_select %p392, %s24, 0
      %s394 = sadd.s32 %s393, %s391
      %s395 = smul.addr %s394, 4
      %s396 = scalar_lea.vmem %s3, %s395
      %p397 = scmp.lt.s32.totalorder %s25, 3
      %s398 = scalar_select %p397, %s25, 3
      %p399 = scmp.lt.s32.totalorder %s24, 0
      %s400 = scalar_select %p399, %s24, 0
      %s401 = sadd.s32 %s400, %s398
      %s402 = smul.addr %s401, 4
      %s403 = scalar_lea.vmem %s4, %s402
      %s404 = smul.u32 2, %s23
      %p405 = scmp.lt.s32.totalorder %s404, 1
      %s406 = scalar_select %p405, %s404, 1
      %p407 = scmp.lt.s32.totalorder %s24, 0
      %s408 = scalar_select %p407, %s24, 0
      %s409 = sadd.s32 %s408, %s406
      %s410 = smul.addr %s409, 4
      %s411 = scalar_lea.vmem %s5, %s410
      %s412 = smul.u32 2, %s23
      %s413 = smul.u32 2, %s23
      %p414 = scmp.lt.s32.totalorder %s413, 1
      %s415 = scalar_select %p414, %s413, 1
      %p416 = scmp.lt.s32.totalorder %s24, 0
      %s417 = scalar_select %p416, %s24, 0
      %s418 = sadd.s32 %s417, %s415
      %s419 = smul.addr %s418, 4
      %s420 = scalar_lea.vmem %s6, %s419
      %s421 = smul.u32 2, %s23
      %p422 = scmp.eq.s32.totalorder %s25, 0
      // Predicated region
      $region41: #{fourier_conv2d.1} parent=39 // pred_check
        %p423 = pneg %p422
      $region42: #{fourier_conv2d.1} parent=39 // pred_check_branch
        %425 = sbr.rel (%p423) target = $region44
      $region43: #{fourier_conv2d.1} parent=39 // pred_region
        %426 = vst [vmem:[%s411] sm:$0xf] 0.0
        %427 = vst [vmem:[%s411 + $0x4] sm:$0xf] 0.0
        %428 = vst [vmem:[%s420] sm:$0xf] 0.0
        %429 = vst [vmem:[%s420 + $0x4] sm:$0xf] 0.0
      $region44: #{fourier_conv2d.1} parent=39 // pred_fallthru
        _
      %v430 = vld [vmem:[%s375] sm:$0x3]
      %v432 = vrot.slane %v430, 1
      %v434 = vld [vmem:[%s382] sm:$0x3]
      %v436 = vrot.slane %v434, 1
      %v438 = vld [vmem:[%s389] sm:$0xf]
      %v439 = vld [vmem:[%s396] sm:$0xf]
      %v440 = vld [vmem:[%s403] sm:$0xf]
      %v441 = vadd.f32 %v430, %v434
      %v442 = vadd.f32 %v432, %v436
      %v445 = vperm.slane %v441, 0
      %v446 = vperm.slane %v442, 0
      %v449 = vmul.f32 %v445, %v438
      %v450 = vmul.f32 %v446, %v438
      %v451 = vld [vmem:[%s411] sm:$0xf]
      %v452 = vld [vmem:[%s411 + $0x4] sm:$0xf]
      %v453 = vperm.slane %v434, 0
      %v454 = vperm.slane %v436, 0
      %v457 = vmul.f32 %v453, %v440
      %v458 = vmul.f32 %v454, %v440
      %v459 = vsub.f32 %v449, %v457
      %v460 = vsub.f32 %v450, %v458
      %v461 = vadd.f32 %v451, %v459
      %v462 = vadd.f32 %v452, %v460
      %463 = vst [vmem:[%s411] sm:$0xf] %v461
      %464 = vst [vmem:[%s411 + $0x4] sm:$0xf] %v462
      %v465 = vld [vmem:[%s420] sm:$0xf]
      %v466 = vld [vmem:[%s420 + $0x4] sm:$0xf]
      %v467 = vperm.slane %v430, 0
      %v468 = vperm.slane %v432, 0
      %v471 = vmul.f32 %v467, %v439
      %v472 = vmul.f32 %v468, %v439
      %v473 = vadd.f32 %v449, %v471
      %v474 = vadd.f32 %v450, %v472
      %v475 = vadd.f32 %v465, %v473
      %v476 = vadd.f32 %v466, %v474
      %477 = vst [vmem:[%s420] sm:$0xf] %v475
      %478 = vst [vmem:[%s420 + $0x4] sm:$0xf] %v476
      %s479 = smul.u32 2, %s23
      %p480 = scmp.lt.s32.totalorder %s479, 1
      %s481 = scalar_select %p480, %s479, 1
      %p482 = scmp.lt.s32.totalorder %s24, 0
      %s483 = scalar_select %p482, %s24, 0
      %s484 = sadd.s32 %s483, %s481
      %s485 = smul.addr %s484, 4
      %s486 = scalar_lea.vmem %s5, %s485
      %s487 = smul.u32 2, %s23
      %p488 = scmp.lt.s32.totalorder %s487, 1
      %s489 = scalar_select %p488, %s487, 1
      %p490 = scmp.lt.s32.totalorder %s24, 0
      %s491 = scalar_select %p490, %s24, 0
      %s492 = sadd.s32 %s491, %s489
      %s493 = smul.addr %s492, 4
      %s494 = scalar_lea.vmem %s6, %s493
      // Predicated region
      $region45: #{fourier_conv2d.1} parent=39 // pred_check
        %p495 = pneg %p197
      $region46: #{fourier_conv2d.1} parent=39 // pred_check_branch
        %497 = sbr.rel (%p495) target = $region48
      $region47: #{fourier_conv2d.1} parent=39 // pred_region
        %s498 = smul.u32 2, %s23
      $region48: #{fourier_conv2d.1} parent=39 // pred_fallthru
        _
      // Predicated region
      $region49: #{fourier_conv2d.1} parent=39 // pred_check
        %p499 = pneg %p225
      $region50: #{fourier_conv2d.1} parent=39 // pred_check_branch
        %501 = sbr.rel (%p499) target = $region52
      $region51: #{fourier_conv2d.1} parent=39 // pred_region
        %s502 = smul.u32 2, %s23
      $region52: #{fourier_conv2d.1} parent=39 // pred_fallthru
        _
      // Predicated region
      $region53: #{fourier_conv2d.1} parent=39 // pred_check
        %p503 = pneg %p197
      $region54: #{fourier_conv2d.1} parent=39 // pred_check_branch
        %505 = sbr.rel (%p503) target = $region56
      $region55: #{fourier_conv2d.1} parent=39 // pred_region
        %s506 = smul.u32 2, %s23
        %p507 = scmp.lt.s32.totalorder %s506, 1
        %s508 = scalar_select %p507, %s506, 1
        %p509 = scmp.lt.s32.totalorder %s24, 0
        %s510 = scalar_select %p509, %s24, 0
        %s511 = sadd.s32 %s510, %s508
        %s512 = smul.addr %s511, 4
        %s513 = scalar_lea.vmem %s5, %s512
      $region56: #{fourier_conv2d.1} parent=39 // pred_fallthru
        _
      // Predicated region
      $region57: #{fourier_conv2d.1} parent=39 // pred_check
        %p514 = pneg %p225
      $region58: #{fourier_conv2d.1} parent=39 // pred_check_branch
        %516 = sbr.rel (%p514) target = $region60
      $region59: #{fourier_conv2d.1} parent=39 // pred_region
        %s517 = smul.u32 2, %s23
        %p518 = scmp.lt.s32.totalorder %s517, 1
        %s519 = scalar_select %p518, %s517, 1
        %p520 = scmp.lt.s32.totalorder %s24, 0
        %s521 = scalar_select %p520, %s24, 0
        %s522 = sadd.s32 %s521, %s519
        %s523 = smul.addr %s522, 4
        %s524 = scalar_lea.vmem %s6, %s523
      $region60: #{fourier_conv2d.1} parent=39 // pred_fallthru
        _
    $region40: #{fourier_conv2d.1} parent=5 // pred_fallthru
      _
    %p525 = scmp.le.s32.totalorder 2, %s13
    // Predicated region
    $region61: #{fourier_conv2d.1} parent=5 // pred_check
      %p526 = pneg %p525
    $region62: #{fourier_conv2d.1} parent=5 // pred_check_branch
      %528 = sbr.rel (%p526) target = $region64
    $region63: #{fourier_conv2d.1} parent=5 // pred_region
      %s529 = ssub.s32 %s13, 2
    $region64: #{fourier_conv2d.1} parent=5 // pred_fallthru
      _
  $region6: #{fourier_conv2d.1} parent=0 // loop_footer
    %s17 = sadd.s32 1, %s13
  $region7: #{fourier_conv2d.1} parent=0 // loop_footer_branch
    %12 = sbr.rel target = $region3
  $region8: #{fourier_conv2d.1} parent=0 // loop_exit
    _

// kernel: reverse.0
$region0: #{reverse.0}
  %s0 = inlined_call_operand.vmem [shape: f32[2,4,16,7], index: 0, kind: input, shape index: {}]
  %s1 = inlined_call_operand.vmem [shape: f32[2,4,16,7], index: 1, kind: output, shape index: {}]
  $region1: #{reverse.0} parent=0
    #allocation0 [shape = 'u8[65536]{0}', space=vmem, size = 0x10000, scoped, tag = 'operand span for operand 0']
    #allocation1 [shape = 'u8[32768]{0}', space=vmem, size = 0x8000, scoped, tag = 'operand span for operand 1']
    %s2 = scalar_lea.vmem [#allocation0], 8
    // Predicated region
    $region2: #{reverse.0} parent=1 // pred_check
      _
    $region3: #{reverse.0} parent=1 // pred_check_branch
      %4 = sbr.rel (0) target = $region5
    $region4: #{reverse.0} parent=1 // pred_region
      // Predicated region
      $region6: #{reverse.0} parent=4 // pred_check
        _
      $region7: #{reverse.0} parent=4 // pred_check_branch
        %6 = sbr.rel (0) target = $region9
      $region8: #{reverse.0} parent=4 // pred_region
        // Predicated region
        $region21: #{reverse.0} parent=8 // pred_check
          _
        $region22: #{reverse.0} parent=8 // pred_check_branch
          %36 = sbr.rel (0) target = $region24
        $region23: #{reverse.0} parent=8 // pred_region
          loop: start=0, step=1, limit=1
          $region25: #{reverse.0} parent=23 // loop_pre_header
            _
          $region26: #{reverse.0} parent=23 // loop_header
            %s38 = sphi 0, %s42
            %p39 = scmp.ge.s32.totalorder %s38, 1
            %s43 = sphi %s0, %s0
            %s44 = sphi %s2, %s2
          $region27: #{reverse.0} parent=23 // loop_header_branch
            %41 = sbr.rel (%p39) target = $region31
          $region28: #{reverse.0} parent=23 // loop_body
            %v45 = vld [vmem:[%s43] sm:$0xff]
            %46 = vst [vmem:[%s44] sm:$0xff] %v45
            %v47 = vld [vmem:[%s43 + $0x8] sm:$0xff]
            %48 = vst [vmem:[%s44 + $0x10] sm:$0xff] %v47
            %v49 = vld [vmem:[%s43 + $0x10] sm:$0xff]
            %50 = vst [vmem:[%s44 + $0x20] sm:$0xff] %v49
            %v51 = vld [vmem:[%s43 + $0x18] sm:$0xff]
            %52 = vst [vmem:[%s44 + $0x30] sm:$0xff] %v51
            %v53 = vld [vmem:[%s43 + $0x20] sm:$0xff]
            %54 = vst [vmem:[%s44 + $0x40] sm:$0xff] %v53
            %v55 = vld [vmem:[%s43 + $0x28] sm:$0xff]
            %56 = vst [vmem:[%s44 + $0x50] sm:$0xff] %v55
            %v57 = vld [vmem:[%s43 + $0x30] sm:$0xff]
            %58 = vst [vmem:[%s44 + $0x60] sm:$0xff] %v57
            %v59 = vld [vmem:[%s43 + $0x38] sm:$0xff]
            %60 = vst [vmem:[%s44 + $0x70] sm:$0xff] %v59
          $region29: #{reverse.0} parent=23 // loop_footer
            %s42 = sadd.s32 1, %s38
          $region30: #{reverse.0} parent=23 // loop_footer_branch
            %37 = sbr.rel target = $region26
          $region31: #{reverse.0} parent=23 // loop_exit
            _
        $region24: #{reverse.0} parent=8 // pred_fallthru
          _
        // Predicated region
        $region32: #{reverse.0} parent=8 // pred_check
          _
        $region33: #{reverse.0} parent=8 // pred_check_branch
          %62 = sbr.rel target = $region35
        $region34: #{reverse.0} parent=8 // pred_region
          _
        $region35: #{reverse.0} parent=8 // pred_fallthru
          _
      $region9: #{reverse.0} parent=4 // pred_fallthru
        _
      // Predicated region
      $region10: #{reverse.0} parent=4 // pred_check
        _
      $region11: #{reverse.0} parent=4 // pred_check_branch
        %8 = sbr.rel target = $region13
      $region12: #{reverse.0} parent=4 // pred_region
        %s10 = ssub.s32 256, 1
        loop: start=0, step=1, limit=1
        $region14: #{reverse.0} parent=12 // loop_pre_header
          _
        $region15: #{reverse.0} parent=12 // loop_header
          %s12 = sphi 0, %s16
          %p13 = scmp.ge.s32.totalorder %s12, 1
          %s17 = sphi %s0, %s0
          %s18 = sphi %s2, %s2
        $region16: #{reverse.0} parent=12 // loop_header_branch
          %15 = sbr.rel (%p13) target = $region20
        $region17: #{reverse.0} parent=12 // loop_body
          %v19 = vld [vmem:[%s17] sm:%s10]
          %20 = vst [vmem:[%s18] sm:%s10] %v19
          %v21 = vld [vmem:[%s17 + $0x8] sm:%s10]
          %22 = vst [vmem:[%s18 + $0x10] sm:%s10] %v21
          %v23 = vld [vmem:[%s17 + $0x10] sm:%s10]
          %24 = vst [vmem:[%s18 + $0x20] sm:%s10] %v23
          %v25 = vld [vmem:[%s17 + $0x18] sm:%s10]
          %26 = vst [vmem:[%s18 + $0x30] sm:%s10] %v25
          %v27 = vld [vmem:[%s17 + $0x20] sm:%s10]
          %28 = vst [vmem:[%s18 + $0x40] sm:%s10] %v27
          %v29 = vld [vmem:[%s17 + $0x28] sm:%s10]
          %30 = vst [vmem:[%s18 + $0x50] sm:%s10] %v29
          %v31 = vld [vmem:[%s17 + $0x30] sm:%s10]
          %32 = vst [vmem:[%s18 + $0x60] sm:%s10] %v31
          %v33 = vld [vmem:[%s17 + $0x38] sm:%s10]
          %34 = vst [vmem:[%s18 + $0x70] sm:%s10] %v33
        $region18: #{reverse.0} parent=12 // loop_footer
          %s16 = sadd.s32 1, %s12
        $region19: #{reverse.0} parent=12 // loop_footer_branch
          %11 = sbr.rel target = $region15
        $region20: #{reverse.0} parent=12 // loop_exit
          _
      $region13: #{reverse.0} parent=4 // pred_fallthru
        _
    $region5: #{reverse.0} parent=1 // pred_fallthru
      _
    %63 = vnop
    %s64 = scalar_lea.vmem [#allocation0], 7
    %v65 = vld [vmem:[%s64] ss:$-1 sm:$0xff]
    %v66 = vrot.slane %v65, 1
    %67 = vst [vmem:[#allocation1] sm:$0xff] %v66
    %s68 = scalar_lea.vmem [#allocation0], 8
    %s69 = scalar_lea.vmem %s68, 7 [#allocation0]
    %v70 = vld [vmem:[%s69] ss:$-1 sm:$0xff]
    %v71 = vrot.slane %v70, 1
    %v72 = vlaneseq
    %v73 = vshrl.u32 %v72, 7
    %vm74 = vcmp.lt.s32.totalorder %v73, 7
    %75 = vst.msk [vmem:[#allocation1] sm:$0xff] %vm74, %v71
    %s76 = scalar_lea.vmem [#allocation1], 8
    %s77 = scalar_lea.vmem [#allocation0], 16
    %s78 = scalar_lea.vmem %s77, 7 [#allocation0]
    %v79 = vld [vmem:[%s78] ss:$-1 sm:$0xff]
    %v80 = vrot.slane %v79, 1
    %81 = vst [vmem:[%s76] sm:$0xff] %v80
    %s82 = scalar_lea.vmem %s77, 8 [#allocation0]
    %s83 = scalar_lea.vmem %s82, 7 [#allocation0]
    %v84 = vld [vmem:[%s83] ss:$-1 sm:$0xff]
    %v85 = vrot.slane %v84, 1
    %v86 = vlaneseq
    %v87 = vshrl.u32 %v86, 7
    %vm88 = vcmp.lt.s32.totalorder %v87, 7
    %89 = vst.msk [vmem:[%s76] sm:$0xff] %vm88, %v85
    %s90 = scalar_lea.vmem [#allocation1], 16
    %s91 = scalar_lea.vmem [#allocation0], 32
    %s92 = scalar_lea.vmem %s91, 7 [#allocation0]
    %v93 = vld [vmem:[%s92] ss:$-1 sm:$0xff]
    %v94 = vrot.slane %v93, 1
    %95 = vst [vmem:[%s90] sm:$0xff] %v94
    %s96 = scalar_lea.vmem %s91, 8 [#allocation0]
    %s97 = scalar_lea.vmem %s96, 7 [#allocation0]
    %v98 = vld [vmem:[%s97] ss:$-1 sm:$0xff]
    %v99 = vrot.slane %v98, 1
    %v100 = vlaneseq
    %v101 = vshrl.u32 %v100, 7
    %vm102 = vcmp.lt.s32.totalorder %v101, 7
    %103 = vst.msk [vmem:[%s90] sm:$0xff] %vm102, %v99
    %s104 = scalar_lea.vmem [#allocation1], 24
    %s105 = scalar_lea.vmem [#allocation0], 48
    %s106 = scalar_lea.vmem %s105, 7 [#allocation0]
    %v107 = vld [vmem:[%s106] ss:$-1 sm:$0xff]
    %v108 = vrot.slane %v107, 1
    %109 = vst [vmem:[%s104] sm:$0xff] %v108
    %s110 = scalar_lea.vmem %s105, 8 [#allocation0]
    %s111 = scalar_lea.vmem %s110, 7 [#allocation0]
    %v112 = vld [vmem:[%s111] ss:$-1 sm:$0xff]
    %v113 = vrot.slane %v112, 1
    %v114 = vlaneseq
    %v115 = vshrl.u32 %v114, 7
    %vm116 = vcmp.lt.s32.totalorder %v115, 7
    %117 = vst.msk [vmem:[%s104] sm:$0xff] %vm116, %v113
    %s118 = scalar_lea.vmem [#allocation1], 32
    %s119 = scalar_lea.vmem [#allocation0], 64
    %s120 = scalar_lea.vmem %s119, 7 [#allocation0]
    %v121 = vld [vmem:[%s120] ss:$-1 sm:$0xff]
    %v122 = vrot.slane %v121, 1
    %123 = vst [vmem:[%s118] sm:$0xff] %v122
    %s124 = scalar_lea.vmem %s119, 8 [#allocation0]
    %s125 = scalar_lea.vmem %s124, 7 [#allocation0]
    %v126 = vld [vmem:[%s125] ss:$-1 sm:$0xff]
    %v127 = vrot.slane %v126, 1
    %v128 = vlaneseq
    %v129 = vshrl.u32 %v128, 7
    %vm130 = vcmp.lt.s32.totalorder %v129, 7
    %131 = vst.msk [vmem:[%s118] sm:$0xff] %vm130, %v127
    %s132 = scalar_lea.vmem [#allocation1], 40
    %s133 = scalar_lea.vmem [#allocation0], 80
    %s134 = scalar_lea.vmem %s133, 7 [#allocation0]
    %v135 = vld [vmem:[%s134] ss:$-1 sm:$0xff]
    %v136 = vrot.slane %v135, 1
    %137 = vst [vmem:[%s132] sm:$0xff] %v136
    %s138 = scalar_lea.vmem %s133, 8 [#allocation0]
    %s139 = scalar_lea.vmem %s138, 7 [#allocation0]
    %v140 = vld [vmem:[%s139] ss:$-1 sm:$0xff]
    %v141 = vrot.slane %v140, 1
    %v142 = vlaneseq
    %v143 = vshrl.u32 %v142, 7
    %vm144 = vcmp.lt.s32.totalorder %v143, 7
    %145 = vst.msk [vmem:[%s132] sm:$0xff] %vm144, %v141
    %s146 = scalar_lea.vmem [#allocation1], 48
    %s147 = scalar_lea.vmem [#allocation0], 96
    %s148 = scalar_lea.vmem %s147, 7 [#allocation0]
    %v149 = vld [vmem:[%s148] ss:$-1 sm:$0xff]
    %v150 = vrot.slane %v149, 1
    %151 = vst [vmem:[%s146] sm:$0xff] %v150
    %s152 = scalar_lea.vmem %s147, 8 [#allocation0]
    %s153 = scalar_lea.vmem %s152, 7 [#allocation0]
    %v154 = vld [vmem:[%s153] ss:$-1 sm:$0xff]
    %v155 = vrot.slane %v154, 1
    %v156 = vlaneseq
    %v157 = vshrl.u32 %v156, 7
    %vm158 = vcmp.lt.s32.totalorder %v157, 7
    %159 = vst.msk [vmem:[%s146] sm:$0xff] %vm158, %v155
    %s160 = scalar_lea.vmem [#allocation1], 56
    %s161 = scalar_lea.vmem [#allocation0], 112
    %s162 = scalar_lea.vmem %s161, 7 [#allocation0]
    %v163 = vld [vmem:[%s162] ss:$-1 sm:$0xff]
    %v164 = vrot.slane %v163, 1
    %165 = vst [vmem:[%s160] sm:$0xff] %v164
    %s166 = scalar_lea.vmem %s161, 8 [#allocation0]
    %s167 = scalar_lea.vmem %s166, 7 [#allocation0]
    %v168 = vld [vmem:[%s167] ss:$-1 sm:$0xff]
    %v169 = vrot.slane %v168, 1
    %v170 = vlaneseq
    %v171 = vshrl.u32 %v170, 7
    %vm172 = vcmp.lt.s32.totalorder %v171, 7
    %173 = vst.msk [vmem:[%s160] sm:$0xff] %vm172, %v169
    // Predicated region
    $region36: #{reverse.0} parent=1 // pred_check
      _
    $region37: #{reverse.0} parent=1 // pred_check_branch
      %175 = sbr.rel (0) target = $region39
    $region38: #{reverse.0} parent=1 // pred_region
      // Predicated region
      $region40: #{reverse.0} parent=38 // pred_check
        _
      $region41: #{reverse.0} parent=38 // pred_check_branch
        %177 = sbr.rel (0) target = $region43
      $region42: #{reverse.0} parent=38 // pred_region
        // Predicated region
        $region55: #{reverse.0} parent=42 // pred_check
          _
        $region56: #{reverse.0} parent=42 // pred_check_branch
          %207 = sbr.rel (0) target = $region58
        $region57: #{reverse.0} parent=42 // pred_region
          loop: start=0, step=1, limit=1
          $region59: #{reverse.0} parent=57 // loop_pre_header
            _
          $region60: #{reverse.0} parent=57 // loop_header
            %s209 = sphi 0, %s213
            %p210 = scmp.ge.s32.totalorder %s209, 1
            %s214 = sphi [#allocation1], [#allocation1]
            %s215 = sphi %s1, %s1
          $region61: #{reverse.0} parent=57 // loop_header_branch
            %212 = sbr.rel (%p210) target = $region65
          $region62: #{reverse.0} parent=57 // loop_body
            %v216 = vld [vmem:[%s214] sm:$0xff]
            %217 = vst [vmem:[%s215] sm:$0xff] %v216
            %v218 = vld [vmem:[%s214 + $0x8] sm:$0xff]
            %219 = vst [vmem:[%s215 + $0x8] sm:$0xff] %v218
            %v220 = vld [vmem:[%s214 + $0x10] sm:$0xff]
            %221 = vst [vmem:[%s215 + $0x10] sm:$0xff] %v220
            %v222 = vld [vmem:[%s214 + $0x18] sm:$0xff]
            %223 = vst [vmem:[%s215 + $0x18] sm:$0xff] %v222
            %v224 = vld [vmem:[%s214 + $0x20] sm:$0xff]
            %225 = vst [vmem:[%s215 + $0x20] sm:$0xff] %v224
            %v226 = vld [vmem:[%s214 + $0x28] sm:$0xff]
            %227 = vst [vmem:[%s215 + $0x28] sm:$0xff] %v226
            %v228 = vld [vmem:[%s214 + $0x30] sm:$0xff]
            %229 = vst [vmem:[%s215 + $0x30] sm:$0xff] %v228
            %v230 = vld [vmem:[%s214 + $0x38] sm:$0xff]
            %231 = vst [vmem:[%s215 + $0x38] sm:$0xff] %v230
          $region63: #{reverse.0} parent=57 // loop_footer
            %s213 = sadd.s32 1, %s209
          $region64: #{reverse.0} parent=57 // loop_footer_branch
            %208 = sbr.rel target = $region60
          $region65: #{reverse.0} parent=57 // loop_exit
            _
        $region58: #{reverse.0} parent=42 // pred_fallthru
          _
        // Predicated region
        $region66: #{reverse.0} parent=42 // pred_check
          _
        $region67: #{reverse.0} parent=42 // pred_check_branch
          %233 = sbr.rel target = $region69
        $region68: #{reverse.0} parent=42 // pred_region
          _
        $region69: #{reverse.0} parent=42 // pred_fallthru
          _
      $region43: #{reverse.0} parent=38 // pred_fallthru
        _
      // Predicated region
      $region44: #{reverse.0} parent=38 // pred_check
        _
      $region45: #{reverse.0} parent=38 // pred_check_branch
        %179 = sbr.rel target = $region47
      $region46: #{reverse.0} parent=38 // pred_region
        %s181 = ssub.s32 256, 1
        loop: start=0, step=1, limit=1
        $region48: #{reverse.0} parent=46 // loop_pre_header
          _
        $region49: #{reverse.0} parent=46 // loop_header
          %s183 = sphi 0, %s187
          %p184 = scmp.ge.s32.totalorder %s183, 1
          %s188 = sphi [#allocation1], [#allocation1]
          %s189 = sphi %s1, %s1
        $region50: #{reverse.0} parent=46 // loop_header_branch
          %186 = sbr.rel (%p184) target = $region54
        $region51: #{reverse.0} parent=46 // loop_body
          %v190 = vld [vmem:[%s188] sm:%s181]
          %191 = vst [vmem:[%s189] sm:%s181] %v190
          %v192 = vld [vmem:[%s188 + $0x8] sm:%s181]
          %193 = vst [vmem:[%s189 + $0x8] sm:%s181] %v192
          %v194 = vld [vmem:[%s188 + $0x10] sm:%s181]
          %195 = vst [vmem:[%s189 + $0x10] sm:%s181] %v194
          %v196 = vld [vmem:[%s188 + $0x18] sm:%s181]
          %197 = vst [vmem:[%s189 + $0x18] sm:%s181] %v196
          %v198 = vld [vmem:[%s188 + $0x20] sm:%s181]
          %199 = vst [vmem:[%s189 + $0x20] sm:%s181] %v198
          %v200 = vld [vmem:[%s188 + $0x28] sm:%s181]
          %201 = vst [vmem:[%s189 + $0x28] sm:%s181] %v200
          %v202 = vld [vmem:[%s188 + $0x30] sm:%s181]
          %203 = vst [vmem:[%s189 + $0x30] sm:%s181] %v202
          %v204 = vld [vmem:[%s188 + $0x38] sm:%s181]
          %205 = vst [vmem:[%s189 + $0x38] sm:%s181] %v204
        $region52: #{reverse.0} parent=46 // loop_footer
          %s187 = sadd.s32 1, %s183
        $region53: #{reverse.0} parent=46 // loop_footer_branch
          %182 = sbr.rel target = $region49
        $region54: #{reverse.0} parent=46 // loop_exit
          _
      $region47: #{reverse.0} parent=38 // pred_fallthru
        _
    $region39: #{reverse.0} parent=1 // pred_fallthru
      _
    %234 = vnop

</llo_original>
